<compile_context>
chip_gen: v7x
topology: tpu7x:2x2x1
jax: 0.10.0
libtpu: 0.0.40
codegen_flags: <defaults>
</compile_context>

<pallas_src>
import functools

import jax
import jax.numpy as jnp
from jax.experimental import pallas as pl
from jax.experimental.pallas import tpu as pltpu

_EPS = 1e-5
# Per-step VMEM budget: v7x has 64 MiB physical (32 MiB scoped default) vs
# 128 MiB on v5e/v6e; stay well under so blocks + f32 accumulator always fit.
_VMEM_GATE_BYTES = 24 * 1024 * 1024


def _tensorcores_per_chip():
    try:
        kind = jax.devices()[0].device_kind.lower()
    except Exception:  # pragma: no cover - defensive
        return 1
    return 2 if ("v7" in kind or "tpu7" in kind) else 1


def _instance_norm_cols(acc_f32, inv_hw, eps):
    """Single-pass per-channel (row) stats over the lane (spatial) axis."""
    s = jnp.sum(acc_f32, axis=-1, keepdims=True)
    s2 = jnp.sum(acc_f32 * acc_f32, axis=-1, keepdims=True)
    mean = s * inv_hw
    # E[x^2] - mean^2 in f32; clamp so rounding can't produce a negative var.
    var = jnp.maximum(s2 * inv_hw - mean * mean, 0.0)
    return (acc_f32 - mean) * jax.lax.rsqrt(var + eps)


def _conv_in_kernel_grid(p_ref, w_ref, o_ref, *, eps, hw):
    # grid=(N,) path (dual-TC chips): one batch instance per step.
    #   p_ref: (1, K, HW) im2col patches (native dtype)
    #   w_ref: (Cout, K)
    #   o_ref: (1, Cout, HW)
    acc = jnp.dot(w_ref[...], p_ref[0], preferred_element_type=jnp.float32)
    o_ref[0] = _instance_norm_cols(acc, 1.0 / hw, eps).astype(o_ref.dtype)


def _conv_in_kernel_collapsed(p_ref, w_ref, o_ref, *, eps, n, hw):
    # Collapsed-batch path (single-TC chips): all N instances in one MXU push.
    #   p_ref: (K, N*HW)   w_ref: (Cout, K)   o_ref: (N, Cout, HW)
    acc = jnp.dot(w_ref[...], p_ref[...], preferred_element_type=jnp.float32)
    inv_hw = 1.0 / hw
    for i in range(n):  # static unroll; HW % 128 == 0 so slices are free views
        blk = acc[:, i * hw:(i + 1) * hw]                  # (Cout, HW)
        o_ref[i] = _instance_norm_cols(blk, inv_hw, eps).astype(o_ref.dtype)


def _im2col_taps(xp, kh, kw, stride, dilation, h_out, w_out):
    """(N, Cin, Hp, Wp) -> (KH*KW, N, Cin, h_out, w_out) tap stack."""
    n, cin, _, _ = xp.shape
    taps = []
    for i in range(kh):
        for j in range(kw):
            h0 = i * dilation
            w0 = j * dilation
            taps.append(jax.lax.slice(
                xp,
                (0, 0, h0, w0),
                (n, cin,
                 h0 + (h_out - 1) * stride + 1,
                 w0 + (w_out - 1) * stride + 1),
                (1, 1, stride, stride)))                    # (N, Cin, ho, wo)
    return jnp.stack(taps, axis=0)                          # (KK, N, Cin, ho, wo)


def convolution_block(x_nchw, weight, bias, *, stride=1, padding=0, rate=1):
    """Forward of ConvolutionBlock. x: [N, Cin, H, W]; weight: [Cout, Cin, KH, KW]."""
    # Dropping `bias` is exact ONLY for the nn.InstanceNorm2d defaults used in
    # the module (affine=False, track_running_stats=False): the per-channel
    # mean subtraction cancels any per-channel constant.  Revisit if affine or
    # running stats are ever enabled.
    del bias
    n, cin, h, w = x_nchw.shape
    cout, cin_w, kh, kw = weight.shape
    assert cin == cin_w
    dilation = rate

    xp = jnp.pad(x_nchw, ((0, 0), (0, 0), (padding, padding), (padding, padding)))
    hp, wp = h + 2 * padding, w + 2 * padding
    h_out = (hp - dilation * (kh - 1) - 1) // stride + 1
    w_out = (wp - dilation * (kw - 1) - 1) // stride + 1
    assert h_out >= 1 and w_out >= 1, "degenerate output spatial size"
    k = kh * kw * cin
    hw = h_out * w_out
    itemsize = jnp.dtype(x_nchw.dtype).itemsize

    # im2col in the wrapper (plain JAX): the kernel sees one dense K-major slab.
    # TODO(synk): at large Cin/H/W this inflates HBM reads ~KH*KW x; switch to
    # an HW-tiled grid (streamed patches) or an in-kernel multi-tap accumulate.
    taps = _im2col_taps(xp, kh, kw, stride, dilation, h_out, w_out)
    # Weight -> (Cout, KH*KW*Cin); K ordering (tap, cin) matches the patch axis.
    w2d = jnp.transpose(weight, (0, 2, 3, 1)).reshape(cout, k)

    dual_tc = _tensorcores_per_chip() >= 2
    collapse = (hw % 128 == 0) and (not dual_tc or n == 1)
    # TODO(synk): on v7x with n == 1, split HW into two "parallel" blocks with
    # a two-pass (sum/sumsq scratch) instance norm so one TensorCore isn't idle.

    cost = pl.CostEstimate(
        flops=2 * n * cout * k * hw,
        bytes_accessed=itemsize * (n * k * hw + cout * k + n * cout * hw),
        transcendentals=n * cout)

    if collapse:
        # Single grid step: patches laid out (K, N*HW) so all N instances ride
        # one lane-dense MXU matmul; per-instance norm over 128-aligned slices.
        vmem_est = (itemsize * (k * n * hw + cout * k + n * cout * hw)
                    + 4 * cout * n * hw)
        # TODO(synk): HW-tiled path (halo rows + two-pass norm over an
        # "arbitrary" grid axis) once this gate trips; raise vmem_limit_bytes
        # via pltpu.CompilerParams when near the limit.
        assert vmem_est <= _VMEM_GATE_BYTES, vmem_est
        patches = jnp.transpose(taps, (0, 2, 1, 3, 4)).reshape(k, n * hw)
        out = pl.pallas_call(
            functools.partial(_conv_in_kernel_collapsed, eps=_EPS, n=n, hw=hw),
            out_shape=jax.ShapeDtypeStruct((n, cout, hw), x_nchw.dtype),
            cost_estimate=cost,
        )(patches, w2d)
        return out.reshape(n, cout, h_out, w_out)           # NCHW, free reshape

    # grid=(N,) path: batch axis "parallel" (TC split on v7x / megacore).
    vmem_est = (itemsize * (2 * k * hw + cout * k + 2 * cout * hw)
                + 4 * cout * hw)
    # TODO(synk): same HW-tiled fallback as above when this gate trips.
    assert vmem_est <= _VMEM_GATE_BYTES, vmem_est
    patches = jnp.transpose(taps, (1, 0, 2, 3, 4)).reshape(n, k, hw)
    p_spec_kwargs = {}
    if n >= 3:
        # Long batch grid: per-step compute << patches DMA, keep DMA ahead.
        p_spec_kwargs["pipeline_mode"] = pl.Buffered(3)
    out = pl.pallas_call(
        functools.partial(_conv_in_kernel_grid, eps=_EPS, hw=hw),
        out_shape=jax.ShapeDtypeStruct((n, cout, hw), x_nchw.dtype),
        grid=(n,),
        in_specs=[
            pl.BlockSpec((1, k, hw), lambda i: (i, 0, 0), **p_spec_kwargs),
            pl.BlockSpec((cout, k), lambda i: (0, 0)),
        ],
        out_specs=pl.BlockSpec((1, cout, hw), lambda i: (i, 0, 0)),
        compiler_params=pltpu.CompilerParams(dimension_semantics=("parallel",)),
        cost_estimate=cost,
    )(patches, w2d)
    return out.reshape(n, cout, h_out, w_out)                # NCHW, free reshape


def _reference(x_nchw, weight, bias, *, stride, padding, rate):
    """Pure-JAX reference (conv + bias + instance norm) for correctness."""
    out = jax.lax.conv_general_dilated(
        x_nchw.astype(jnp.float32), weight.astype(jnp.float32),
        window_strides=(stride, stride),
        padding=[(padding, padding), (padding, padding)],
        rhs_dilation=(rate, rate),
        dimension_numbers=("NCHW", "OIHW", "NCHW"))
    out = out + bias.reshape(1, -1, 1, 1)
    mean = jnp.mean(out, axis=(2, 3), keepdims=True)
    var = jnp.mean((out - mean) ** 2, axis=(2, 3), keepdims=True)
    return (out - mean) * jax.lax.rsqrt(var + _EPS)


if __name__ == "__main__":
    key = jax.random.PRNGKey(0)
    k_x, k_w, k_b = jax.random.split(key, 3)

    # ConvolutionBlock(in_channels=4, out_channels=8, kernel=3, stride=1,
    #                  padding=1, rate=1)
    N, CIN, COUT, H, W, K = 2, 4, 8, 16, 16, 3
    STRIDE, PADDING, RATE = 1, 1, 1

    x = jax.random.normal(k_x, (N, CIN, H, W), dtype=jnp.float32)
    weight = jax.random.normal(k_w, (COUT, CIN, K, K), dtype=jnp.float32) * 0.1
    bias = jax.random.normal(k_b, (COUT,), dtype=jnp.float32) * 0.1

    out = convolution_block(x, weight, bias, stride=STRIDE, padding=PADDING, rate=RATE)
    out = jax.block_until_ready(out)

    ref = _reference(x, weight, bias, stride=STRIDE, padding=PADDING, rate=RATE)
    assert out.shape == (N, COUT, H, W), out.shape
    assert jnp.allclose(out, ref, atol=1e-4, rtol=1e-4), \
        float(jnp.max(jnp.abs(out - ref)))

    print("KERNEL_OK")
</pallas_src>

<mosaic_0001>
module attributes {stable_mosaic.version = 11 : i64} {
  func.func @_conv_in_kernel_collapsed(%arg0: memref<36x512xf32, #tpu.memory_space<vmem>>, %arg1: memref<8x36xf32, #tpu.memory_space<vmem>>, %arg2: memref<2x8x256xf32, #tpu.memory_space<vmem>>) attributes {dimension_semantics = [], scalar_prefetch = 0 : i64, scratch_operands = 0 : i64, tpu.core_type = #tpu.core_type<tc>} {
    %c0 = arith.constant 0 : index
    %c0_0 = arith.constant 0 : index
    %0 = vector.load %arg1[%c0, %c0_0] : memref<8x36xf32, #tpu.memory_space<vmem>>, vector<8x36xf32>
    %c0_1 = arith.constant 0 : index
    %c0_2 = arith.constant 0 : index
    %1 = vector.load %arg0[%c0_1, %c0_2] : memref<36x512xf32, #tpu.memory_space<vmem>>, vector<36x512xf32>
    %cst = arith.constant dense<0.000000e+00> : vector<8x512xf32>
    %2 = tpu.matmul %0, %1, %cst {dimension_numbers = #tpu.dot_dimension_numbers<[1], [0], [0], [1], [0, 0, 1, 1], [], []>} : vector<8x36xf32>, vector<36x512xf32>, vector<8x512xf32> -> vector<8x512xf32>
    %3 = vector.extract_strided_slice %2 {offsets = [0, 0], sizes = [8, 256], strides = [1, 1]} : vector<8x512xf32> to vector<8x256xf32>
    %cst_3 = arith.constant dense<0.000000e+00> : vector<8xf32>
    %4 = vector.multi_reduction <add>, %3, %cst_3 [1] : vector<8x256xf32> to vector<8xf32>
    %5 = vector.shape_cast %4 : vector<8xf32> to vector<8x1xf32>
    %6 = arith.mulf %3, %3 : vector<8x256xf32>
    %cst_4 = arith.constant dense<0.000000e+00> : vector<8xf32>
    %7 = vector.multi_reduction <add>, %6, %cst_4 [1] : vector<8x256xf32> to vector<8xf32>
    %8 = vector.shape_cast %7 : vector<8xf32> to vector<8x1xf32>
    %cst_5 = arith.constant 3.906250e-03 : f32
    %9 = vector.broadcast %cst_5 : f32 to vector<8x1xf32>
    %10 = arith.mulf %5, %9 : vector<8x1xf32>
    %cst_6 = arith.constant 3.906250e-03 : f32
    %11 = vector.broadcast %cst_6 : f32 to vector<8x1xf32>
    %12 = arith.mulf %8, %11 : vector<8x1xf32>
    %13 = arith.mulf %10, %10 : vector<8x1xf32>
    %14 = arith.subf %12, %13 : vector<8x1xf32>
    %cst_7 = arith.constant 0.000000e+00 : f32
    %15 = vector.broadcast %cst_7 : f32 to vector<8x1xf32>
    %16 = arith.maximumf %14, %15 : vector<8x1xf32>
    %17 = vector.broadcast %10 : vector<8x1xf32> to vector<8x256xf32>
    %18 = arith.subf %3, %17 : vector<8x256xf32>
    %cst_8 = arith.constant 9.99999974E-6 : f32
    %19 = vector.broadcast %cst_8 : f32 to vector<8x1xf32>
    %20 = arith.addf %16, %19 : vector<8x1xf32>
    %21 = math.rsqrt %20 : vector<8x1xf32>
    %22 = vector.broadcast %21 : vector<8x1xf32> to vector<8x256xf32>
    %23 = arith.mulf %18, %22 : vector<8x256xf32>
    %c0_9 = arith.constant 0 : index
    %c0_10 = arith.constant 0 : index
    %c0_11 = arith.constant 0 : index
    %24 = vector.load %arg2[%c0_9, %c0_10, %c0_11] : memref<2x8x256xf32, #tpu.memory_space<vmem>>, vector<1x8x256xf32>
    %25 = vector.shape_cast %24 : vector<1x8x256xf32> to vector<8x256xf32>
    %26 = vector.shape_cast %23 : vector<8x256xf32> to vector<1x8x256xf32>
    tpu.vector_store %arg2[%c0_9, %c0_10, %c0_11], %26 {strides = array<i32>} : memref<2x8x256xf32, #tpu.memory_space<vmem>>, vector<1x8x256xf32>,
    %27 = vector.extract_strided_slice %2 {offsets = [0, 256], sizes = [8, 256], strides = [1, 1]} : vector<8x512xf32> to vector<8x256xf32>
    %cst_12 = arith.constant dense<0.000000e+00> : vector<8xf32>
    %28 = vector.multi_reduction <add>, %27, %cst_12 [1] : vector<8x256xf32> to vector<8xf32>
    %29 = vector.shape_cast %28 : vector<8xf32> to vector<8x1xf32>
    %30 = arith.mulf %27, %27 : vector<8x256xf32>
    %cst_13 = arith.constant dense<0.000000e+00> : vector<8xf32>
    %31 = vector.multi_reduction <add>, %30, %cst_13 [1] : vector<8x256xf32> to vector<8xf32>
    %32 = vector.shape_cast %31 : vector<8xf32> to vector<8x1xf32>
    %cst_14 = arith.constant 3.906250e-03 : f32
    %33 = vector.broadcast %cst_14 : f32 to vector<8x1xf32>
    %34 = arith.mulf %29, %33 : vector<8x1xf32>
    %cst_15 = arith.constant 3.906250e-03 : f32
    %35 = vector.broadcast %cst_15 : f32 to vector<8x1xf32>
    %36 = arith.mulf %32, %35 : vector<8x1xf32>
    %37 = arith.mulf %34, %34 : vector<8x1xf32>
    %38 = arith.subf %36, %37 : vector<8x1xf32>
    %cst_16 = arith.constant 0.000000e+00 : f32
    %39 = vector.broadcast %cst_16 : f32 to vector<8x1xf32>
    %40 = arith.maximumf %38, %39 : vector<8x1xf32>
    %41 = vector.broadcast %34 : vector<8x1xf32> to vector<8x256xf32>
    %42 = arith.subf %27, %41 : vector<8x256xf32>
    %cst_17 = arith.constant 9.99999974E-6 : f32
    %43 = vector.broadcast %cst_17 : f32 to vector<8x1xf32>
    %44 = arith.addf %40, %43 : vector<8x1xf32>
    %45 = math.rsqrt %44 : vector<8x1xf32>
    %46 = vector.broadcast %45 : vector<8x1xf32> to vector<8x256xf32>
    %47 = arith.mulf %42, %46 : vector<8x256xf32>
    %c1 = arith.constant 1 : index
    %c0_18 = arith.constant 0 : index
    %c0_19 = arith.constant 0 : index
    %48 = vector.load %arg2[%c1, %c0_18, %c0_19] : memref<2x8x256xf32, #tpu.memory_space<vmem>>, vector<1x8x256xf32>
    %49 = vector.shape_cast %48 : vector<1x8x256xf32> to vector<8x256xf32>
    %50 = vector.shape_cast %47 : vector<8x256xf32> to vector<1x8x256xf32>
    tpu.vector_store %arg2[%c1, %c0_18, %c0_19], %50 {strides = array<i32>} : memref<2x8x256xf32, #tpu.memory_space<vmem>>, vector<1x8x256xf32>,
    return
  }
}

</mosaic_0001>

<llo_original>
// kernel: tpu_custom_call.1
$region0: #{tpu_custom_call.1}
  #allocation0 [shape = 'u32[]', space=smem, size = 0x4, offset = 0x4, fixed_abs, tag = 'smem constant byte address 0x4 - core index']
  #allocation1 [shape = 'u32[144,128]{1,0:T(1,128)}', space=vmem, size = 0x12000, scoped, tag = 'internal scratch']
  %s0 = inlined_call_operand.hbm [shape: f32[36,512], index: 0, kind: input, shape index: {}]
  %s1 = inlined_call_operand.hbm [shape: f32[8,36], index: 1, kind: input, shape index: {}]
  %s2 = inlined_call_operand.hbm [shape: f32[2,8,256], index: 2, kind: output, shape index: {}]
  %s3 = sld [smem:[#allocation0]]
  $region26: #{tpu_custom_call.1} parent=0
    _
  %s5 = ssub.s32 1, %s3
  %s6 = scalar_select 0, %s5, %s3
  $region1: #{tpu_custom_call.1} parent=0
    #allocation2 [shape = 'u8[81920]{0}', space=vmem, size = 0x14000, scoped, tag = 'input window, operand 0, single buffered']
    #allocation3 [shape = 's32[1]{0}', space=sflag, size = 0x4, scoped, tag = 'scoped memory for tpu_custom_call.1']
    #allocation4 [shape = 's32[1]{0}', space=sflag, size = 0x4, scoped, tag = 'scoped memory for tpu_custom_call.1']
    #allocation5 [shape = 'u8[4096]{0}', space=vmem, size = 0x1000, scoped, tag = 'input window, operand 1, single buffered']
    #allocation6 [shape = 's32[1]{0}', space=sflag, size = 0x4, scoped, tag = 'scoped memory for tpu_custom_call.1']
    #allocation7 [shape = 'u8[16384]{0}', space=vmem, size = 0x4000, scoped, tag = 'output window, operand 0, single buffered']
    %7 = vsyncpa [#allocation3], 0
    %8 = vsyncpa [#allocation6], 0
    %9 = vsyncpa [#allocation4], 0
    // Predicated region
    $region2: #{tpu_custom_call.1} parent=1 // pred_check
      _
    $region3: #{tpu_custom_call.1} parent=1 // pred_check_branch
      %11 = sbr.rel (0) target = $region5
    $region4: #{tpu_custom_call.1} parent=1 // pred_region
      %s13 = ssub.s32 2560, 2560
      %14 = vsyncadd [#allocation3], %s13
      %s15 = sshll.u32 [#allocation2], 4
      %s16 = int_to_ptr.vmem [resolvable:$true] %s15
      %21 = dma.hbm_to_vmem [thread:$0]  %s0, 2560, %s16, [#allocation3], 512, 512, 32
    $region5: #{tpu_custom_call.1} parent=1 // pred_fallthru
      _
    // Predicated region
    $region6: #{tpu_custom_call.1} parent=1 // pred_check
      _
    $region7: #{tpu_custom_call.1} parent=1 // pred_check_branch
      %23 = sbr.rel (0) target = $region9
    $region8: #{tpu_custom_call.1} parent=1 // pred_region
      %s25 = ssub.s32 128, 128
      %26 = vsyncadd [#allocation6], %s25
      %s28 = sshll.u32 [#allocation5], 4
      %s29 = int_to_ptr.vmem [resolvable:$true] %s28
      %31 = dma.hbm_to_vmem [thread:$0]  %s1, 128, %s29, [#allocation6]
    $region9: #{tpu_custom_call.1} parent=1 // pred_fallthru
      _
    // Predicated region
    $region10: #{tpu_custom_call.1} parent=1 // pred_check
      _
    $region11: #{tpu_custom_call.1} parent=1 // pred_check_branch
      %33 = sbr.rel (0) target = $region13
    $region12: #{tpu_custom_call.1} parent=1 // pred_region
      %34 = dma.done [#allocation3], 2560
    $region13: #{tpu_custom_call.1} parent=1 // pred_fallthru
      _
    // Predicated region
    $region14: #{tpu_custom_call.1} parent=1 // pred_check
      _
    $region15: #{tpu_custom_call.1} parent=1 // pred_check_branch
      %36 = sbr.rel (0) target = $region17
    $region16: #{tpu_custom_call.1} parent=1 // pred_region
      %37 = dma.done [#allocation6], 128
    $region17: #{tpu_custom_call.1} parent=1 // pred_fallthru
      _
    %v38 = vld [vmem:[#allocation5] sm:$0xff]
    %v39 = vld [vmem:[#allocation2] sm:$0xff]
    %v40 = vld [vmem:[#allocation2 + $0x8] sm:$0xff]
    %v41 = vld [vmem:[#allocation2 + $0x10] sm:$0xff]
    %v42 = vld [vmem:[#allocation2 + $0x18] sm:$0xff]
    %v43 = vld [vmem:[#allocation2 + $0x20] sm:$0xff]
    %v44 = vld [vmem:[#allocation2 + $0x28] sm:$0xff]
    %v45 = vld [vmem:[#allocation2 + $0x30] sm:$0xff]
    %v46 = vld [vmem:[#allocation2 + $0x38] sm:$0xff]
    %v47 = vld [vmem:[#allocation2 + $0x40] sm:$0xff]
    %v48 = vld [vmem:[#allocation2 + $0x48] sm:$0xff]
    %v49 = vld [vmem:[#allocation2 + $0x50] sm:$0xff]
    %v50 = vld [vmem:[#allocation2 + $0x58] sm:$0xff]
    %v51 = vld [vmem:[#allocation2 + $0x60] sm:$0xff]
    %v52 = vld [vmem:[#allocation2 + $0x68] sm:$0xff]
    %v53 = vld [vmem:[#allocation2 + $0x70] sm:$0xff]
    %v54 = vld [vmem:[#allocation2 + $0x78] sm:$0xff]
    %v55 = vld [vmem:[#allocation2 + $0x80] sm:$0xf]
    %v56 = vld [vmem:[#allocation2 + $0x88] sm:$0xf]
    %v57 = vld [vmem:[#allocation2 + $0x90] sm:$0xf]
    %v58 = vld [vmem:[#allocation2 + $0x98] sm:$0xf]
    %vm59 = vcmask 293888
    %v61 = vsel %vm59, %v38, 0
    %vm63 = vcmask 1043456
    %v65 = vsel %vm63, %v55, 0
    %v68 = vsel %vm63, %v56, 0
    %v71 = vsel %vm63, %v57, 0
    %v74 = vsel %vm63, %v58, 0
    %76 = vmatprep.subr.mxu0 %v40
    %77 = vmatpush1.msra.mxu0 %v39
    %78 = vmatprep.subr.mxu0 %v44
    %79 = vmatpush1.msra.mxu0 %v43
    %80 = vmatprep.subr.mxu0 %v48
    %81 = vmatpush1.msra.mxu0 %v47
    %82 = vmatprep.subr.mxu0 %v52
    %83 = vmatpush1.msra.mxu0 %v51
    %84 = vmatprep.subr.mxu0 %v68
    %85 = vmatpush1.msra.mxu0 %v65
    %86 = vmatprep.subr.mxu0 0.0
    %87 = vmatpush1.msra.mxu0 0.0
    %88 = vmatprep.subr.mxu0 0.0
    %89 = vmatpush1.msra.mxu0 0.0
    %90 = vmatprep.subr.mxu0 0.0
    %91 = vmatpush1.msra.mxu0 0.0
    %92 = vmatprep.subr.mxu0 0.0
    %93 = vmatpush1.msra.mxu0 0.0
    %94 = vmatprep.subr.mxu0 0.0
    %95 = vmatpush1.msra.mxu0 0.0
    %96 = vmatprep.subr.mxu0 0.0
    %97 = vmatpush1.msra.mxu0 0.0
    %98 = vmatprep.subr.mxu0 0.0
    %99 = vmatpush1.msra.mxu0 0.0
    %100 = vmatprep.subr.mxu0 0.0
    %101 = vmatpush1.msra.mxu0 0.0
    %102 = vmatprep.subr.mxu0 0.0
    %103 = vmatpush1.msra.mxu0 0.0
    %104 = vmatprep.subr.mxu0 0.0
    %105 = vmatpush1.msra.mxu0 0.0
    %106 = vmatprep.subr.mxu0 0.0
    %107 = vmatpush1.msra.mxu0 0.0
    %108 = vmatprep.subr.mxu0 0.0
    %109 = vmatpush1.msra.mxu0 0.0
    %110 = vmatprep.subr.mxu0 0.0
    %111 = vmatpush1.msra.mxu0 0.0
    %112 = vmatprep.subr.mxu0 0.0
    %113 = vmatpush1.msra.mxu0 0.0
    %114 = vmatprep.subr.mxu0 0.0
    %115 = vmatpush1.msra.mxu0 0.0
    %116 = vmatprep.subr.mxu0 0.0
    %117 = vmatpush1.msra.mxu0 0.0
    %118 = vmatprep.subr.mxu0 0.0
    %119 = vmatpush1.msra.mxu0 0.0
    %120 = vmatprep.subr.mxu0 0.0
    %121 = vmatpush1.msra.mxu0 0.0
    %122 = vmatprep.subr.mxu0 0.0
    %123 = vmatpush1.msra.mxu0 0.0
    %124 = vmatprep.subr.mxu0 0.0
    %125 = vmatpush1.msra.mxu0 0.0
    %126 = vmatprep.subr.mxu0 0.0
    %127 = vmatpush1.msra.mxu0 0.0
    %128 = vmatprep.subr.mxu0 0.0
    %129 = vmatpush1.msra.mxu0 0.0
    %130 = vmatprep.subr.mxu0 0.0
    %131 = vmatpush1.msra.mxu0 0.0
    %132 = vmatprep.subr.mxu0 0.0
    %133 = vmatpush1.msra.mxu0 0.0
    %134 = vmatprep.subr.mxu0 0.0
    %135 = vmatpush1.msra.mxu0 0.0
    %136 = vmatprep.subr.mxu0 0.0
    %137 = vmatpush1.msra.mxu0 0.0
    %138 = vmatprep.subr.mxu0 0.0
    %139 = vmatpush1.msra.mxu0 0.0
    %140 = vmatprep.mubr.f32.mxu0 0.0
    %141 = vmatmul.mubr.f32.gmra.mrb[0].mxu0 %v61
    %v142 = vpop.f32.mrb[0].mxu0
    %v143 = vadd.f32 0.0, %v142
    %v144 = vpop.f32.mrb[0].mxu0
    %v145 = vadd.f32 0.0, %v144
    %146 = vdwg.mxu0
    %147 = vmatprep.subr.mxu0 %v42
    %148 = vmatpush1.msra.mxu0 %v41
    %149 = vmatprep.subr.mxu0 %v46
    %150 = vmatpush1.msra.mxu0 %v45
    %151 = vmatprep.subr.mxu0 %v50
    %152 = vmatpush1.msra.mxu0 %v49
    %153 = vmatprep.subr.mxu0 %v54
    %154 = vmatpush1.msra.mxu0 %v53
    %155 = vmatprep.subr.mxu0 %v74
    %156 = vmatpush1.msra.mxu0 %v71
    %157 = vmatprep.subr.mxu0 0.0
    %158 = vmatpush1.msra.mxu0 0.0
    %159 = vmatprep.subr.mxu0 0.0
    %160 = vmatpush1.msra.mxu0 0.0
    %161 = vmatprep.subr.mxu0 0.0
    %162 = vmatpush1.msra.mxu0 0.0
    %163 = vmatprep.subr.mxu0 0.0
    %164 = vmatpush1.msra.mxu0 0.0
    %165 = vmatprep.subr.mxu0 0.0
    %166 = vmatpush1.msra.mxu0 0.0
    %167 = vmatprep.subr.mxu0 0.0
    %168 = vmatpush1.msra.mxu0 0.0
    %169 = vmatprep.subr.mxu0 0.0
    %170 = vmatpush1.msra.mxu0 0.0
    %171 = vmatprep.subr.mxu0 0.0
    %172 = vmatpush1.msra.mxu0 0.0
    %173 = vmatprep.subr.mxu0 0.0
    %174 = vmatpush1.msra.mxu0 0.0
    %175 = vmatprep.subr.mxu0 0.0
    %176 = vmatpush1.msra.mxu0 0.0
    %177 = vmatprep.subr.mxu0 0.0
    %178 = vmatpush1.msra.mxu0 0.0
    %179 = vmatprep.subr.mxu0 0.0
    %180 = vmatpush1.msra.mxu0 0.0
    %181 = vmatprep.subr.mxu0 0.0
    %182 = vmatpush1.msra.mxu0 0.0
    %183 = vmatprep.subr.mxu0 0.0
    %184 = vmatpush1.msra.mxu0 0.0
    %185 = vmatprep.subr.mxu0 0.0
    %186 = vmatpush1.msra.mxu0 0.0
    %187 = vmatprep.subr.mxu0 0.0
    %188 = vmatpush1.msra.mxu0 0.0
    %189 = vmatprep.subr.mxu0 0.0
    %190 = vmatpush1.msra.mxu0 0.0
    %191 = vmatprep.subr.mxu0 0.0
    %192 = vmatpush1.msra.mxu0 0.0
    %193 = vmatprep.subr.mxu0 0.0
    %194 = vmatpush1.msra.mxu0 0.0
    %195 = vmatprep.subr.mxu0 0.0
    %196 = vmatpush1.msra.mxu0 0.0
    %197 = vmatprep.subr.mxu0 0.0
    %198 = vmatpush1.msra.mxu0 0.0
    %199 = vmatprep.subr.mxu0 0.0
    %200 = vmatpush1.msra.mxu0 0.0
    %201 = vmatprep.subr.mxu0 0.0
    %202 = vmatpush1.msra.mxu0 0.0
    %203 = vmatprep.subr.mxu0 0.0
    %204 = vmatpush1.msra.mxu0 0.0
    %205 = vmatprep.subr.mxu0 0.0
    %206 = vmatpush1.msra.mxu0 0.0
    %207 = vmatprep.subr.mxu0 0.0
    %208 = vmatpush1.msra.mxu0 0.0
    %209 = vmatprep.subr.mxu0 0.0
    %210 = vmatpush1.msra.mxu0 0.0
    %211 = vmatprep.mubr.f32.mxu0 0.0
    %212 = vmatmul.mubr.f32.gmra.mrb[0].mxu0 %v61
    %v213 = vpop.f32.mrb[0].mxu0
    %v214 = vadd.f32 0.0, %v213
    %v215 = vpop.f32.mrb[0].mxu0
    %v216 = vadd.f32 0.0, %v215
    %217 = vdwg.mxu0
    %v218 = vadd.f32 %v143, %v145
    %219 = vadd.xlane.f32.xlu0 %v218
    %v220 = vpop.xlane.xlu0 %219
    %v221 = vmul.f32 %v143, %v143
    %v222 = vmul.f32 %v145, %v145
    %v223 = vadd.f32 %v221, %v222
    %224 = vadd.xlane.f32.xlu0 %v223
    %v225 = vpop.xlane.xlu0 %224
    %v226 = vmul.f32 %v220, 0.00390625
    %v227 = vmul.f32 %v225, 0.00390625
    %v228 = vmul.f32 %v226, %v226
    %v229 = vsub.f32 %v227, %v228
    %v230 = vmax.f32 %v229, 0.0
    %v231 = vsub.f32 %v143, %v226
    %v232 = vsub.f32 %v145, %v226
    %v233 = vadd.f32 %v230, 1e-05
    %v234 = vrsqrt.pop %v233
    %v235 = vmul.f32 %v231, %v234
    %v236 = vmul.f32 %v232, %v234
    %237 = vst [vmem:[#allocation7] sm:$0xff] %v235
    %238 = vst [vmem:[#allocation7 + $0x8] sm:$0xff] %v236
    %v239 = vadd.f32 %v214, %v216
    %240 = vadd.xlane.f32.xlu0 %v239
    %v241 = vpop.xlane.xlu0 %240
    %v242 = vmul.f32 %v214, %v214
    %v243 = vmul.f32 %v216, %v216
    %v244 = vadd.f32 %v242, %v243
    %245 = vadd.xlane.f32.xlu0 %v244
    %v246 = vpop.xlane.xlu0 %245
    %v247 = vmul.f32 %v241, 0.00390625
    %v248 = vmul.f32 %v246, 0.00390625
    %v249 = vmul.f32 %v247, %v247
    %v250 = vsub.f32 %v248, %v249
    %v251 = vmax.f32 %v250, 0.0
    %v252 = vsub.f32 %v214, %v247
    %v253 = vsub.f32 %v216, %v247
    %v254 = vadd.f32 %v251, 1e-05
    %v255 = vrsqrt.pop %v254
    %v256 = vmul.f32 %v252, %v255
    %v257 = vmul.f32 %v253, %v255
    %s258 = scalar_lea.vmem [#allocation7], 16
    %259 = vst [vmem:[%s258] sm:$0xff] %v256
    %260 = vst [vmem:[%s258 + $0x8] sm:$0xff] %v257
    // Predicated region
    $region18: #{tpu_custom_call.1} parent=1 // pred_check
      _
    $region19: #{tpu_custom_call.1} parent=1 // pred_check_branch
      %262 = sbr.rel (0) target = $region21
    $region20: #{tpu_custom_call.1} parent=1 // pred_region
      %s264 = ssub.s32 512, 512
      %265 = vsyncadd [#allocation4], %s264
      %s266 = sshll.u32 [#allocation7], 4
      %s267 = int_to_ptr.vmem [resolvable:$true] %s266
      %272 = dma.vmem_to_hbm [thread:$0]  %s267, 512, %s2, [#allocation4], 256, 256, 16
    $region21: #{tpu_custom_call.1} parent=1 // pred_fallthru
      _
    // Predicated region
    $region22: #{tpu_custom_call.1} parent=1 // pred_check
      _
    $region23: #{tpu_custom_call.1} parent=1 // pred_check_branch
      %274 = sbr.rel (0) target = $region25
    $region24: #{tpu_custom_call.1} parent=1 // pred_region
      %275 = dma.done [#allocation4], 512
    $region25: #{tpu_custom_call.1} parent=1 // pred_fallthru
      _
    %276 = vsyncpa [#allocation3], 1
    %277 = vsyncpa [#allocation6], 1
    %278 = vsyncpa [#allocation4], 1

</llo_original>
